<compile_context>
chip_gen: v7x
topology: tpu7x:2x2x1
jax: 0.10.0
libtpu: 0.0.40
codegen_flags: <defaults>
</compile_context>

<pallas_src>
import functools

import jax
import jax.numpy as jnp
from jax.experimental import pallas as pl
from jax.experimental.pallas import tpu as pltpu

HIDDEN = 128
LANE = 128


def _round_up(n, m):
    return ((n + m - 1) // m) * m


def dqn_kernel(x_ref, w1_ref, b1_ref, w2_ref, b2_ref, w3_ref, b3_ref, o_ref):
    # x tile is raw f32 (tb, n_in); cast to bf16 in-kernel (cheap VPU op) so the HBM x
    # stream stays unpadded. All matmuls run bf16 on the MXU with f32 accumulation;
    # bias + ReLU stay in f32 on the VPU (required on v5e, fine everywhere).
    x = x_ref[...].astype(jnp.bfloat16)
    h1 = jnp.dot(x, w1_ref[...], preferred_element_type=jnp.float32)
    h1 = jnp.maximum(h1 + b1_ref[...], 0.0)
    h2 = jnp.dot(h1.astype(jnp.bfloat16), w2_ref[...], preferred_element_type=jnp.float32)
    h2 = jnp.maximum(h2 + b2_ref[...], 0.0)
    out = jnp.dot(h2.astype(jnp.bfloat16), w3_ref[...], preferred_element_type=jnp.float32)
    o_ref[...] = (out + b3_ref[...]).astype(o_ref.dtype)


def prepare_params(params):
    """One-time packing: bf16 weights, lane-dense (128-wide) padded output head.

    Call once; pass the result to dqn_forward to keep per-call dispatch count minimal.
    Returns (packed_params, n_outputs).
    """
    w1, b1, w2, b2, w3, b3 = params
    n_out = w3.shape[1]
    out_p = _round_up(n_out, LANE)
    w1p = w1.astype(jnp.bfloat16)                                        # (n_in, 128), unpadded
    w2p = w2.astype(jnp.bfloat16)                                        # (128, 128)
    w3p = jnp.zeros((HIDDEN, out_p), jnp.bfloat16).at[:, :n_out].set(w3.astype(jnp.bfloat16))
    b3p = jnp.zeros((1, out_p), jnp.float32).at[:, :n_out].set(b3)
    packed = (w1p, b1, w2p, b2, w3p, b3p)
    return jax.tree_util.tree_map(jax.device_put, packed), n_out


@functools.partial(jax.jit, static_argnames=("n_out", "tb", "out_dtype"))
def dqn_forward(x, packed_params, n_out, *, tb=512, out_dtype=jnp.float32):
    """Fused DQN forward. x: (B, n_in) f32; packed_params from prepare_params.

    Returns (B, n_out) in out_dtype (default f32, matching the PyTorch module).
    """
    w1p, b1, w2p, b2, w3p, b3p = packed_params
    B, n_in = x.shape
    out_p = w3p.shape[1]

    # Batch tile: multiple of 8 (sublane rule), big enough to amortize per-step overhead,
    # split into >=2 steps whenever possible so v7x's two TensorCores both get work.
    tb = max(8, _round_up(tb, 8))
    tb_eff = min(tb, _round_up(B, 8))
    if B >= 16 and pl.cdiv(B, tb_eff) < 2:
        tb_eff = max(8, _round_up(pl.cdiv(B, 2), 8))
    grid = (pl.cdiv(B, tb_eff),)  # partial last tile is masked by Pallas -- no batch padding

    resident = lambda shape: pl.BlockSpec(shape, lambda i: (0, 0))  # single DMA, stays in VMEM

    out = pl.pallas_call(
        dqn_kernel,
        out_shape=jax.ShapeDtypeStruct((B, out_p), out_dtype),
        grid=grid,
        in_specs=[
            pl.BlockSpec((tb_eff, n_in), lambda i: (i, 0)),  # raw f32 x tiles stream
            resident((n_in, HIDDEN)),
            resident((1, HIDDEN)),
            resident((HIDDEN, HIDDEN)),
            resident((1, HIDDEN)),
            resident((HIDDEN, out_p)),
            resident((1, out_p)),
        ],
        out_specs=pl.BlockSpec((tb_eff, out_p), lambda i: (i, 0)),  # lane-dense 128-wide stores
        compiler_params=pltpu.CompilerParams(
            dimension_semantics=("parallel",),  # v7x: shard batch steps across both TCs
        ),
    )(x, w1p, b1, w2p, b2, w3p, b3p)
    return out[:, :n_out]


def init_params(key, n_inputs, n_outputs):
    # PyTorch nn.Linear default init: U(-1/sqrt(fan_in), 1/sqrt(fan_in)) for W and b.
    ks = jax.random.split(key, 6)

    def lin(kw, kb, fan_in, fan_out):
        bound = 1.0 / jnp.sqrt(jnp.float32(fan_in))
        w = jax.random.uniform(kw, (fan_in, fan_out), jnp.float32, -bound, bound)
        b = jax.random.uniform(kb, (1, fan_out), jnp.float32, -bound, bound)
        return w, b

    w1, b1 = lin(ks[0], ks[1], n_inputs, HIDDEN)
    w2, b2 = lin(ks[2], ks[3], HIDDEN, HIDDEN)
    w3, b3 = lin(ks[4], ks[5], HIDDEN, n_outputs)
    return (w1, b1, w2, b2, w3, b3)


def dqn_reference_f32(x, params):
    w1, b1, w2, b2, w3, b3 = params
    h1 = jnp.maximum(x @ w1 + b1, 0.0)
    h2 = jnp.maximum(h1 @ w2 + b2, 0.0)
    return h2 @ w3 + b3


def dqn_reference_bf16(x, params):
    # Same arithmetic as the kernel: bf16 matmul operands, f32 accumulation, f32 bias/ReLU.
    w1, b1, w2, b2, w3, b3 = params
    bf = jnp.bfloat16
    dot = lambda a, b: jnp.dot(a.astype(bf), b.astype(bf), preferred_element_type=jnp.float32)
    h1 = jnp.maximum(dot(x, w1) + b1, 0.0)
    h2 = jnp.maximum(dot(h1, w2) + b2, 0.0)
    return dot(h2, w3) + b3


if __name__ == "__main__":
    key = jax.random.PRNGKey(0)
    k_x, k_x2, k_x3, k_p = jax.random.split(key, 4)

    n_inputs, n_outputs = 4, 2  # CartPole-like DQN head
    params = init_params(k_p, n_inputs, n_outputs)
    packed, n_out = prepare_params(params)  # one-time bf16 pack / pad

    # Replay-buffer-sized batch: exercises the batch grid (2 tiles of 256).
    batch = 512
    x = jax.random.normal(k_x, (batch, n_inputs), jnp.float32)
    out = jax.block_until_ready(dqn_forward(x, packed, n_out))
    assert out.shape == (batch, n_outputs)
    assert out.dtype == jnp.float32
    assert jnp.allclose(out, dqn_reference_bf16(x, params), atol=1e-2, rtol=1e-2)
    assert jnp.allclose(out, dqn_reference_f32(x, params), atol=5e-2, rtol=5e-2)

    # Awkward batch size: partial (masked) last tile via cdiv grid, no batch padding.
    x_odd = jax.random.normal(k_x2, (300, n_inputs), jnp.float32)
    out_odd = jax.block_until_ready(dqn_forward(x_odd, packed, n_out))
    assert out_odd.shape == (300, n_outputs)
    assert jnp.allclose(out_odd, dqn_reference_bf16(x_odd, params), atol=1e-2, rtol=1e-2)

    # Small batch + bf16 output path (fine for DQN argmax / TD targets).
    x_small = jax.random.normal(k_x3, (8, n_inputs), jnp.float32)
    out_small = jax.block_until_ready(
        dqn_forward(x_small, packed, n_out, out_dtype=jnp.bfloat16))
    assert out_small.shape == (8, n_outputs)
    assert out_small.dtype == jnp.bfloat16
    assert jnp.allclose(out_small.astype(jnp.float32), dqn_reference_bf16(x_small, params),
                        atol=5e-2, rtol=5e-2)

    print("KERNEL_OK")
</pallas_src>

<mosaic_0001>
module attributes {stable_mosaic.version = 11 : i64} {
  func.func @dqn_kernel(%arg0: i32, %arg1: memref<256x4xf32, #tpu.memory_space<vmem>>, %arg2: memref<4x128xbf16, #tpu.memory_space<vmem>>, %arg3: memref<1x128xf32, #tpu.memory_space<vmem>>, %arg4: memref<128x128xbf16, #tpu.memory_space<vmem>>, %arg5: memref<1x128xf32, #tpu.memory_space<vmem>>, %arg6: memref<128x128xbf16, #tpu.memory_space<vmem>>, %arg7: memref<1x128xf32, #tpu.memory_space<vmem>>, %arg8: memref<256x128xf32, #tpu.memory_space<vmem>>) attributes {dimension_semantics = [#tpu.dimension_semantics<parallel>], iteration_bounds = array<i64: 2>, scalar_prefetch = 0 : i64, scratch_operands = 0 : i64, tpu.core_type = #tpu.core_type<tc>, window_params = [{transform_indices = @transform_0, window_bounds = array<i64: 256, 4>}, {pipeline_mode = #tpu.pipeline_mode<synchronous>, transform_indices = @transform_1, window_bounds = array<i64: 4, 128>}, {pipeline_mode = #tpu.pipeline_mode<synchronous>, transform_indices = @transform_2, window_bounds = array<i64: 1, 128>}, {pipeline_mode = #tpu.pipeline_mode<synchronous>, transform_indices = @transform_3, window_bounds = array<i64: 128, 128>}, {pipeline_mode = #tpu.pipeline_mode<synchronous>, transform_indices = @transform_4, window_bounds = array<i64: 1, 128>}, {pipeline_mode = #tpu.pipeline_mode<synchronous>, transform_indices = @transform_5, window_bounds = array<i64: 128, 128>}, {pipeline_mode = #tpu.pipeline_mode<synchronous>, transform_indices = @transform_6, window_bounds = array<i64: 1, 128>}, {transform_indices = @transform_7, window_bounds = array<i64: 256, 128>}]} {
    %c0 = arith.constant 0 : index
    %c0_0 = arith.constant 0 : index
    %0 = vector.load %arg1[%c0, %c0_0] : memref<256x4xf32, #tpu.memory_space<vmem>>, vector<256x4xf32>
    %1 = arith.truncf %0 : vector<256x4xf32> to vector<256x4xbf16>
    %c0_1 = arith.constant 0 : index
    %c0_2 = arith.constant 0 : index
    %2 = vector.load %arg2[%c0_1, %c0_2] : memref<4x128xbf16, #tpu.memory_space<vmem>>, vector<4x128xbf16>
    %cst = arith.constant dense<0.000000e+00> : vector<256x128xf32>
    %3 = tpu.matmul %1, %2, %cst {dimension_numbers = #tpu.dot_dimension_numbers<[1], [0], [0], [1], [0, 0, 1, 1], [], []>} : vector<256x4xbf16>, vector<4x128xbf16>, vector<256x128xf32> -> vector<256x128xf32>
    %c0_3 = arith.constant 0 : index
    %c0_4 = arith.constant 0 : index
    %4 = vector.load %arg3[%c0_3, %c0_4] : memref<1x128xf32, #tpu.memory_space<vmem>>, vector<1x128xf32>
    %5 = vector.broadcast %4 : vector<1x128xf32> to vector<256x128xf32>
    %6 = arith.addf %3, %5 : vector<256x128xf32>
    %cst_5 = arith.constant 0.000000e+00 : f32
    %7 = vector.broadcast %cst_5 : f32 to vector<256x128xf32>
    %8 = arith.maximumf %6, %7 : vector<256x128xf32>
    %9 = arith.truncf %8 : vector<256x128xf32> to vector<256x128xbf16>
    %c0_6 = arith.constant 0 : index
    %c0_7 = arith.constant 0 : index
    %10 = vector.load %arg4[%c0_6, %c0_7] : memref<128x128xbf16, #tpu.memory_space<vmem>>, vector<128x128xbf16>
    %cst_8 = arith.constant dense<0.000000e+00> : vector<256x128xf32>
    %11 = tpu.matmul %9, %10, %cst_8 {dimension_numbers = #tpu.dot_dimension_numbers<[1], [0], [0], [1], [0, 0, 1, 1], [], []>} : vector<256x128xbf16>, vector<128x128xbf16>, vector<256x128xf32> -> vector<256x128xf32>
    %c0_9 = arith.constant 0 : index
    %c0_10 = arith.constant 0 : index
    %12 = vector.load %arg5[%c0_9, %c0_10] : memref<1x128xf32, #tpu.memory_space<vmem>>, vector<1x128xf32>
    %13 = vector.broadcast %12 : vector<1x128xf32> to vector<256x128xf32>
    %14 = arith.addf %11, %13 : vector<256x128xf32>
    %cst_11 = arith.constant 0.000000e+00 : f32
    %15 = vector.broadcast %cst_11 : f32 to vector<256x128xf32>
    %16 = arith.maximumf %14, %15 : vector<256x128xf32>
    %17 = arith.truncf %16 : vector<256x128xf32> to vector<256x128xbf16>
    %c0_12 = arith.constant 0 : index
    %c0_13 = arith.constant 0 : index
    %18 = vector.load %arg6[%c0_12, %c0_13] : memref<128x128xbf16, #tpu.memory_space<vmem>>, vector<128x128xbf16>
    %cst_14 = arith.constant dense<0.000000e+00> : vector<256x128xf32>
    %19 = tpu.matmul %17, %18, %cst_14 {dimension_numbers = #tpu.dot_dimension_numbers<[1], [0], [0], [1], [0, 0, 1, 1], [], []>} : vector<256x128xbf16>, vector<128x128xbf16>, vector<256x128xf32> -> vector<256x128xf32>
    %c0_15 = arith.constant 0 : index
    %c0_16 = arith.constant 0 : index
    %20 = vector.load %arg7[%c0_15, %c0_16] : memref<1x128xf32, #tpu.memory_space<vmem>>, vector<1x128xf32>
    %21 = vector.broadcast %20 : vector<1x128xf32> to vector<256x128xf32>
    %22 = arith.addf %19, %21 : vector<256x128xf32>
    %c0_17 = arith.constant 0 : index
    %c0_18 = arith.constant 0 : index
    %23 = vector.load %arg8[%c0_17, %c0_18] : memref<256x128xf32, #tpu.memory_space<vmem>>, vector<256x128xf32>
    tpu.vector_store %arg8[%c0_17, %c0_18], %22 {strides = array<i32>} : memref<256x128xf32, #tpu.memory_space<vmem>>, vector<256x128xf32>,
    return
  }
  func.func @transform_0(%arg0: i32) -> (i32, i32) {
    %c0_i32 = arith.constant 0 : i32
    %c0_i32_0 = arith.constant 0 : i32
    return %arg0, %c0_i32 : i32, i32
  }
  func.func @transform_1(%arg0: i32) -> (i32, i32) {
    %c0_i32 = arith.constant 0 : i32
    %c0_i32_0 = arith.constant 0 : i32
    %c0_i32_1 = arith.constant 0 : i32
    return %c0_i32, %c0_i32_0 : i32, i32
  }
  func.func @transform_2(%arg0: i32) -> (i32, i32) {
    %c0_i32 = arith.constant 0 : i32
    %c0_i32_0 = arith.constant 0 : i32
    %c0_i32_1 = arith.constant 0 : i32
    return %c0_i32, %c0_i32_0 : i32, i32
  }
  func.func @transform_3(%arg0: i32) -> (i32, i32) {
    %c0_i32 = arith.constant 0 : i32
    %c0_i32_0 = arith.constant 0 : i32
    %c0_i32_1 = arith.constant 0 : i32
    return %c0_i32, %c0_i32_0 : i32, i32
  }
  func.func @transform_4(%arg0: i32) -> (i32, i32) {
    %c0_i32 = arith.constant 0 : i32
    %c0_i32_0 = arith.constant 0 : i32
    %c0_i32_1 = arith.constant 0 : i32
    return %c0_i32, %c0_i32_0 : i32, i32
  }
  func.func @transform_5(%arg0: i32) -> (i32, i32) {
    %c0_i32 = arith.constant 0 : i32
    %c0_i32_0 = arith.constant 0 : i32
    %c0_i32_1 = arith.constant 0 : i32
    return %c0_i32, %c0_i32_0 : i32, i32
  }
  func.func @transform_6(%arg0: i32) -> (i32, i32) {
    %c0_i32 = arith.constant 0 : i32
    %c0_i32_0 = arith.constant 0 : i32
    %c0_i32_1 = arith.constant 0 : i32
    return %c0_i32, %c0_i32_0 : i32, i32
  }
  func.func @transform_7(%arg0: i32) -> (i32, i32) {
    %c0_i32 = arith.constant 0 : i32
    %c0_i32_0 = arith.constant 0 : i32
    return %arg0, %c0_i32 : i32, i32
  }
}

</mosaic_0001>

<llo_original>
// kernel: dqn_forward.1
$region0: #{dqn_forward.1}
  #allocation0 [shape = 'u32[]', space=smem, size = 0x4, offset = 0x4, fixed_abs, tag = 'smem constant byte address 0x4 - core index']
  #allocation1 [shape = 'u32[144,128]{1,0:T(1,128)}', space=vmem, size = 0x12000, scoped, tag = 'internal scratch']
  %s0 = inlined_call_operand.vmem [shape: f32[512,4], index: 0, kind: input, shape index: {}]
  %s1 = inlined_call_operand.vmem [shape: bf16[4,128], index: 1, kind: input, shape index: {}]
  %s2 = inlined_call_operand.vmem [shape: f32[1,128], index: 2, kind: input, shape index: {}]
  %s3 = inlined_call_operand.vmem [shape: bf16[128,128], index: 3, kind: input, shape index: {}]
  %s4 = inlined_call_operand.vmem [shape: f32[1,128], index: 4, kind: input, shape index: {}]
  %s5 = inlined_call_operand.vmem [shape: bf16[128,128], index: 5, kind: input, shape index: {}]
  %s6 = inlined_call_operand.vmem [shape: f32[1,128], index: 6, kind: input, shape index: {}]
  %s7 = inlined_call_operand.vmem [shape: f32[512,128], index: 7, kind: output, shape index: {}]
  %s8 = sld [smem:[#allocation0]]
  $region61: #{dqn_forward.1} parent=0
    _
  %s10 = ssub.s32 1, %s8
  %s11 = scalar_select 0, %s10, %s8
  loop: start=0, step=1, limit=4
  $region2: #{dqn_forward.1} parent=0 // loop_pre_header
    _
  $region3: #{dqn_forward.1} parent=0 // loop_header
    %s13 = sphi 0, %s17
    %p14 = scmp.ge.s32.totalorder %s13, 4
    %s23 = sphi 0, %s25
    %s26 = sphi 0, %s23
    %s27 = sphi 0, %s26
    %s43 = sphi 0, %s27
    %s47 = sphi 0, %s47
    %s49 = sphi 0, %s47
    %s50 = sphi 0, %s49
    %s64 = sphi 0, %s50
    %s68 = sphi 0, %s68
    %s70 = sphi 0, %s68
    %s71 = sphi 0, %s70
    %s85 = sphi 0, %s71
    %s89 = sphi 0, %s89
    %s91 = sphi 0, %s89
    %s92 = sphi 0, %s91
    %s106 = sphi 0, %s92
    %s110 = sphi 0, %s110
    %s112 = sphi 0, %s110
    %s113 = sphi 0, %s112
    %s127 = sphi 0, %s113
    %s131 = sphi 0, %s131
    %s133 = sphi 0, %s131
    %s134 = sphi 0, %s133
    %s148 = sphi 0, %s134
    %s152 = sphi 0, %s152
    %s154 = sphi 0, %s152
    %s155 = sphi 0, %s154
    %s169 = sphi 0, %s155
    %s175 = sphi 0, %s177
    %s178 = sphi 0, %s175
    %s179 = sphi 0, %s178
    %s195 = sphi 0, %s179
  $region4: #{dqn_forward.1} parent=0 // loop_header_branch
    %16 = sbr.rel (%p14) target = $region8
  $region5: #{dqn_forward.1} parent=0 // loop_body
    %s18 = ssub.s32 %s13, 1
    %s19 = ssub.s32 %s13, 2
    %s20 = sadd.s32 %s13, 1
    %s21 = ssub.s32 %s13, %s20
    %p22 = scmp.eq.s32.totalorder %s21, 0
    %s24 = sadd.s32 %s23, 1
    %s25 = scalar_select %p22, %s23, %s24
    %p28 = pneg %p22
    %p29 = scmp.eq.s32.totalorder %s13, 1
    %p30 = por %p28, %p29
    %p31 = scmp.ne.s32.totalorder %s23, %s26
    %p32 = scmp.eq.s32.totalorder %s13, 0
    %p33 = por %p31, %p32
    %p34 = scmp.ne.s32.totalorder %s23, %s26
    %p35 = scmp.eq.s32.totalorder %s18, 1
    %p36 = por %p34, %p35
    %p37 = scmp.ne.s32.totalorder %s26, %s27
    %p38 = scmp.eq.s32.totalorder %s18, 0
    %p39 = por %p37, %p38
    %p40 = scmp.ne.s32.totalorder %s26, %s27
    %p41 = scmp.eq.s32.totalorder %s19, 1
    %p42 = por %p40, %p41
    %p44 = scmp.ne.s32.totalorder %s27, %s43
    %p45 = scmp.eq.s32.totalorder %s19, 0
    %p46 = por %p44, %p45
    %s48 = sadd.s32 %s47, 1
    %p51 = scmp.eq.s32.totalorder %s13, 1
    %p52 = scmp.ne.s32.totalorder %s47, %s49
    %p53 = scmp.eq.s32.totalorder %s13, 0
    %p54 = por %p52, %p53
    %p55 = scmp.ne.s32.totalorder %s47, %s49
    %p56 = scmp.eq.s32.totalorder %s18, 1
    %p57 = por %p55, %p56
    %p58 = scmp.ne.s32.totalorder %s49, %s50
    %p59 = scmp.eq.s32.totalorder %s18, 0
    %p60 = por %p58, %p59
    %p61 = scmp.ne.s32.totalorder %s49, %s50
    %p62 = scmp.eq.s32.totalorder %s19, 1
    %p63 = por %p61, %p62
    %p65 = scmp.ne.s32.totalorder %s50, %s64
    %p66 = scmp.eq.s32.totalorder %s19, 0
    %p67 = por %p65, %p66
    %s69 = sadd.s32 %s68, 1
    %p72 = scmp.eq.s32.totalorder %s13, 1
    %p73 = scmp.ne.s32.totalorder %s68, %s70
    %p74 = scmp.eq.s32.totalorder %s13, 0
    %p75 = por %p73, %p74
    %p76 = scmp.ne.s32.totalorder %s68, %s70
    %p77 = scmp.eq.s32.totalorder %s18, 1
    %p78 = por %p76, %p77
    %p79 = scmp.ne.s32.totalorder %s70, %s71
    %p80 = scmp.eq.s32.totalorder %s18, 0
    %p81 = por %p79, %p80
    %p82 = scmp.ne.s32.totalorder %s70, %s71
    %p83 = scmp.eq.s32.totalorder %s19, 1
    %p84 = por %p82, %p83
    %p86 = scmp.ne.s32.totalorder %s71, %s85
    %p87 = scmp.eq.s32.totalorder %s19, 0
    %p88 = por %p86, %p87
    %s90 = sadd.s32 %s89, 1
    %p93 = scmp.eq.s32.totalorder %s13, 1
    %p94 = scmp.ne.s32.totalorder %s89, %s91
    %p95 = scmp.eq.s32.totalorder %s13, 0
    %p96 = por %p94, %p95
    %p97 = scmp.ne.s32.totalorder %s89, %s91
    %p98 = scmp.eq.s32.totalorder %s18, 1
    %p99 = por %p97, %p98
    %p100 = scmp.ne.s32.totalorder %s91, %s92
    %p101 = scmp.eq.s32.totalorder %s18, 0
    %p102 = por %p100, %p101
    %p103 = scmp.ne.s32.totalorder %s91, %s92
    %p104 = scmp.eq.s32.totalorder %s19, 1
    %p105 = por %p103, %p104
    %p107 = scmp.ne.s32.totalorder %s92, %s106
    %p108 = scmp.eq.s32.totalorder %s19, 0
    %p109 = por %p107, %p108
    %s111 = sadd.s32 %s110, 1
    %p114 = scmp.eq.s32.totalorder %s13, 1
    %p115 = scmp.ne.s32.totalorder %s110, %s112
    %p116 = scmp.eq.s32.totalorder %s13, 0
    %p117 = por %p115, %p116
    %p118 = scmp.ne.s32.totalorder %s110, %s112
    %p119 = scmp.eq.s32.totalorder %s18, 1
    %p120 = por %p118, %p119
    %p121 = scmp.ne.s32.totalorder %s112, %s113
    %p122 = scmp.eq.s32.totalorder %s18, 0
    %p123 = por %p121, %p122
    %p124 = scmp.ne.s32.totalorder %s112, %s113
    %p125 = scmp.eq.s32.totalorder %s19, 1
    %p126 = por %p124, %p125
    %p128 = scmp.ne.s32.totalorder %s113, %s127
    %p129 = scmp.eq.s32.totalorder %s19, 0
    %p130 = por %p128, %p129
    %s132 = sadd.s32 %s131, 1
    %p135 = scmp.eq.s32.totalorder %s13, 1
    %p136 = scmp.ne.s32.totalorder %s131, %s133
    %p137 = scmp.eq.s32.totalorder %s13, 0
    %p138 = por %p136, %p137
    %p139 = scmp.ne.s32.totalorder %s131, %s133
    %p140 = scmp.eq.s32.totalorder %s18, 1
    %p141 = por %p139, %p140
    %p142 = scmp.ne.s32.totalorder %s133, %s134
    %p143 = scmp.eq.s32.totalorder %s18, 0
    %p144 = por %p142, %p143
    %p145 = scmp.ne.s32.totalorder %s133, %s134
    %p146 = scmp.eq.s32.totalorder %s19, 1
    %p147 = por %p145, %p146
    %p149 = scmp.ne.s32.totalorder %s134, %s148
    %p150 = scmp.eq.s32.totalorder %s19, 0
    %p151 = por %p149, %p150
    %s153 = sadd.s32 %s152, 1
    %p156 = scmp.eq.s32.totalorder %s13, 1
    %p157 = scmp.ne.s32.totalorder %s152, %s154
    %p158 = scmp.eq.s32.totalorder %s13, 0
    %p159 = por %p157, %p158
    %p160 = scmp.ne.s32.totalorder %s152, %s154
    %p161 = scmp.eq.s32.totalorder %s18, 1
    %p162 = por %p160, %p161
    %p163 = scmp.ne.s32.totalorder %s154, %s155
    %p164 = scmp.eq.s32.totalorder %s18, 0
    %p165 = por %p163, %p164
    %p166 = scmp.ne.s32.totalorder %s154, %s155
    %p167 = scmp.eq.s32.totalorder %s19, 1
    %p168 = por %p166, %p167
    %p170 = scmp.ne.s32.totalorder %s155, %s169
    %p171 = scmp.eq.s32.totalorder %s19, 0
    %p172 = por %p170, %p171
    %s173 = ssub.s32 %s13, %s20
    %p174 = scmp.eq.s32.totalorder %s173, 0
    %s176 = sadd.s32 %s175, 1
    %s177 = scalar_select %p174, %s175, %s176
    %p180 = pneg %p174
    %p181 = scmp.eq.s32.totalorder %s13, 1
    %p182 = por %p180, %p181
    %p183 = scmp.ne.s32.totalorder %s175, %s178
    %p184 = scmp.eq.s32.totalorder %s13, 0
    %p185 = por %p183, %p184
    %p186 = scmp.ne.s32.totalorder %s175, %s178
    %p187 = scmp.eq.s32.totalorder %s18, 1
    %p188 = por %p186, %p187
    %p189 = scmp.ne.s32.totalorder %s178, %s179
    %p190 = scmp.eq.s32.totalorder %s18, 0
    %p191 = por %p189, %p190
    %p192 = scmp.ne.s32.totalorder %s178, %s179
    %p193 = scmp.eq.s32.totalorder %s19, 1
    %p194 = por %p192, %p193
    %p196 = scmp.ne.s32.totalorder %s179, %s195
    %p197 = scmp.eq.s32.totalorder %s19, 0
    %p198 = por %p196, %p197
    %p199 = scmp.le.s32.totalorder 1, %s13
    %p200 = scmp.lt.s32.totalorder %s13, 3
    %p201 = pnand %p199, %p200
    %p202 = pneg %p201
    // Predicated region
    $region9: #{dqn_forward.1} parent=5 // pred_check
      _
    $region10: #{dqn_forward.1} parent=5 // pred_check_branch
      %204 = sbr.rel (%p201) target = $region12
    $region11: #{dqn_forward.1} parent=5 // pred_region
      %s205 = ssub.s32 %s13, 1
      // Predicated region
      $region13: #{dqn_forward.1} parent=11 // pred_check
        %p206 = pneg %p60
      $region14: #{dqn_forward.1} parent=11 // pred_check_branch
        %208 = sbr.rel (%p206) target = $region16
      $region15: #{dqn_forward.1} parent=11 // pred_region
        _
      $region16: #{dqn_forward.1} parent=11 // pred_fallthru
        _
      // Predicated region
      $region17: #{dqn_forward.1} parent=11 // pred_check
        %p209 = pneg %p81
      $region18: #{dqn_forward.1} parent=11 // pred_check_branch
        %211 = sbr.rel (%p209) target = $region20
      $region19: #{dqn_forward.1} parent=11 // pred_region
        _
      $region20: #{dqn_forward.1} parent=11 // pred_fallthru
        _
      // Predicated region
      $region21: #{dqn_forward.1} parent=11 // pred_check
        %p212 = pneg %p102
      $region22: #{dqn_forward.1} parent=11 // pred_check_branch
        %214 = sbr.rel (%p212) target = $region24
      $region23: #{dqn_forward.1} parent=11 // pred_region
        _
      $region24: #{dqn_forward.1} parent=11 // pred_fallthru
        _
      // Predicated region
      $region25: #{dqn_forward.1} parent=11 // pred_check
        %p215 = pneg %p123
      $region26: #{dqn_forward.1} parent=11 // pred_check_branch
        %217 = sbr.rel (%p215) target = $region28
      $region27: #{dqn_forward.1} parent=11 // pred_region
        _
      $region28: #{dqn_forward.1} parent=11 // pred_fallthru
        _
      // Predicated region
      $region29: #{dqn_forward.1} parent=11 // pred_check
        %p218 = pneg %p144
      $region30: #{dqn_forward.1} parent=11 // pred_check_branch
        %220 = sbr.rel (%p218) target = $region32
      $region31: #{dqn_forward.1} parent=11 // pred_region
        _
      $region32: #{dqn_forward.1} parent=11 // pred_fallthru
        _
      // Predicated region
      $region33: #{dqn_forward.1} parent=11 // pred_check
        %p221 = pneg %p165
      $region34: #{dqn_forward.1} parent=11 // pred_check_branch
        %223 = sbr.rel (%p221) target = $region36
      $region35: #{dqn_forward.1} parent=11 // pred_region
        _
      $region36: #{dqn_forward.1} parent=11 // pred_fallthru
        _
    $region12: #{dqn_forward.1} parent=5 // pred_fallthru
      _
    %p224 = scmp.lt.s32.totalorder %s13, 2
    // Predicated region
    $region37: #{dqn_forward.1} parent=5 // pred_check
      %p225 = pneg %p224
    $region38: #{dqn_forward.1} parent=5 // pred_check_branch
      %227 = sbr.rel (%p225) target = $region40
    $region39: #{dqn_forward.1} parent=5 // pred_region
      // Predicated region
      $region41: #{dqn_forward.1} parent=39 // pred_check
        %p228 = pneg %p33
      $region42: #{dqn_forward.1} parent=39 // pred_check_branch
        %230 = sbr.rel (%p228) target = $region44
      $region43: #{dqn_forward.1} parent=39 // pred_region
        %s231 = smul.u32 32, %s13
        %p232 = scmp.lt.s32.totalorder %s231, 63
        %s233 = scalar_select %p232, %s231, 63
        %s234 = smul.addr %s233, 8
        %s235 = scalar_lea.vmem %s0, %s234
        %s236 = smul.u32 32, %s13
      $region44: #{dqn_forward.1} parent=39 // pred_fallthru
        _
    $region40: #{dqn_forward.1} parent=5 // pred_fallthru
      _
    %p237 = scmp.le.s32.totalorder 1, %s13
    %p238 = scmp.lt.s32.totalorder %s13, 3
    %p239 = pnand %p237, %p238
    %p240 = pneg %p239
    // Predicated region
    $region45: #{dqn_forward.1} parent=5 // pred_check
      _
    $region46: #{dqn_forward.1} parent=5 // pred_check_branch
      %242 = sbr.rel (%p239) target = $region48
    $region47: #{dqn_forward.1} parent=5 // pred_region
      %s243 = ssub.s32 %s13, 1
      %s244 = smul.u32 32, %s18
      %p245 = scmp.lt.s32.totalorder %s244, 63
      %s246 = scalar_select %p245, %s244, 63
      %s247 = smul.addr %s246, 8
      %s248 = scalar_lea.vmem %s0, %s247
      %p249 = pneg %p39
      %p250 = pneg %p36
      %p251 = pneg %p60
      %p252 = pneg %p57
      %p253 = pneg %p81
      %p254 = pneg %p78
      %p255 = pneg %p102
      %p256 = pneg %p99
      %p257 = pneg %p123
      %p258 = pneg %p120
      %p259 = pneg %p144
      %p260 = pneg %p141
      %p261 = pneg %p165
      %p262 = pneg %p162
      %p263 = pneg %p191
      %p264 = pneg %p188
      %s265 = smul.u32 32, %s18
      %p266 = scmp.lt.s32.totalorder %s265, 63
      %s267 = scalar_select %p266, %s265, 63
      %s268 = smul.addr %s267, 8
      %s269 = scalar_lea.vmem %s7, %s268
      %s270 = smul.u32 32, %s18
      %p271 = scmp.lt.s32.totalorder %s270, 63
      %s272 = scalar_select %p271, %s270, 63
      %s273 = smul.addr %s272, 8
      %s274 = scalar_lea.vmem %s0, %s273
      %s275 = smul.u32 32, %s18
      %s276 = smul.u32 32, %s18
      %p277 = scmp.lt.s32.totalorder %s276, 63
      %s278 = scalar_select %p277, %s276, 63
      %s279 = smul.addr %s278, 8
      %s280 = scalar_lea.vmem %s7, %s279
      %s281 = smul.u32 32, %s18
      %v283 = vld [vmem:[%s274] sm:$0xff]
      %v284 = vld [vmem:[%s274 + $0x8] sm:$0xff]
      %v285 = vld [vmem:[%s274 + $0x10] sm:$0xff]
      %v286 = vld [vmem:[%s274 + $0x18] sm:$0xff]
      %v287 = vld [vmem:[%s274 + $0x20] sm:$0xff]
      %v288 = vld [vmem:[%s274 + $0x28] sm:$0xff]
      %v289 = vld [vmem:[%s274 + $0x30] sm:$0xff]
      %v290 = vld [vmem:[%s274 + $0x38] sm:$0xff]
      %v291 = vld [vmem:[%s274 + $0x40] sm:$0xff]
      %v292 = vld [vmem:[%s274 + $0x48] sm:$0xff]
      %v293 = vld [vmem:[%s274 + $0x50] sm:$0xff]
      %v294 = vld [vmem:[%s274 + $0x58] sm:$0xff]
      %v295 = vld [vmem:[%s274 + $0x60] sm:$0xff]
      %v296 = vld [vmem:[%s274 + $0x68] sm:$0xff]
      %v297 = vld [vmem:[%s274 + $0x70] sm:$0xff]
      %v298 = vld [vmem:[%s274 + $0x78] sm:$0xff]
      %v299 = vld [vmem:[%s274 + $0x80] sm:$0xff]
      %v300 = vld [vmem:[%s274 + $0x88] sm:$0xff]
      %v301 = vld [vmem:[%s274 + $0x90] sm:$0xff]
      %v302 = vld [vmem:[%s274 + $0x98] sm:$0xff]
      %v303 = vld [vmem:[%s274 + $0xa0] sm:$0xff]
      %v304 = vld [vmem:[%s274 + $0xa8] sm:$0xff]
      %v305 = vld [vmem:[%s274 + $0xb0] sm:$0xff]
      %v306 = vld [vmem:[%s274 + $0xb8] sm:$0xff]
      %v307 = vld [vmem:[%s274 + $0xc0] sm:$0xff]
      %v308 = vld [vmem:[%s274 + $0xc8] sm:$0xff]
      %v309 = vld [vmem:[%s274 + $0xd0] sm:$0xff]
      %v310 = vld [vmem:[%s274 + $0xd8] sm:$0xff]
      %v311 = vld [vmem:[%s274 + $0xe0] sm:$0xff]
      %v312 = vld [vmem:[%s274 + $0xe8] sm:$0xff]
      %v313 = vld [vmem:[%s274 + $0xf0] sm:$0xff]
      %v314 = vld [vmem:[%s274 + $0xf8] sm:$0xff]
      %v315 = vpack.c.bf16 %v284, %v283
      %v316 = vpack.c.bf16 %v286, %v285
      %v317 = vpack.c.bf16 %v288, %v287
      %v318 = vpack.c.bf16 %v290, %v289
      %v319 = vpack.c.bf16 %v292, %v291
      %v320 = vpack.c.bf16 %v294, %v293
      %v321 = vpack.c.bf16 %v296, %v295
      %v322 = vpack.c.bf16 %v298, %v297
      %v323 = vpack.c.bf16 %v300, %v299
      %v324 = vpack.c.bf16 %v302, %v301
      %v325 = vpack.c.bf16 %v304, %v303
      %v326 = vpack.c.bf16 %v306, %v305
      %v327 = vpack.c.bf16 %v308, %v307
      %v328 = vpack.c.bf16 %v310, %v309
      %v329 = vpack.c.bf16 %v312, %v311
      %v330 = vpack.c.bf16 %v314, %v313
      %v331 = vld [vmem:[%s1] sm:$0x3]
      %v332 = vld [vmem:[%s2] sm:$0x1]
      %v334 = vlaneseq
      %v335 = vshrl.u32 %v334, 7
      %v336 = vsub.s32 0, %v335
      %v337 = vrot.slane %v332, %v336
      %vm339 = vcmask 31744
      %v341 = vsel %vm339, %v315, 0
      %v344 = vsel %vm339, %v316, 0
      %v347 = vsel %vm339, %v317, 0
      %v350 = vsel %vm339, %v318, 0
      %v353 = vsel %vm339, %v319, 0
      %v356 = vsel %vm339, %v320, 0
      %v359 = vsel %vm339, %v321, 0
      %v362 = vsel %vm339, %v322, 0
      %v365 = vsel %vm339, %v323, 0
      %v368 = vsel %vm339, %v324, 0
      %v371 = vsel %vm339, %v325, 0
      %v374 = vsel %vm339, %v326, 0
      %v377 = vsel %vm339, %v327, 0
      %v380 = vsel %vm339, %v328, 0
      %v383 = vsel %vm339, %v329, 0
      %v386 = vsel %vm339, %v330, 0
      %vm388 = vcmask 1041408
      %v390 = vsel %vm388, %v331, 0
      %392 = vmatprep.subr.bf16.mxu0 0
      %393 = vmatpush1.bf16.msra.mxu0 %v390
      %394 = vmatprep.subr.bf16.mxu0 0
      %395 = vmatpush1.bf16.msra.mxu0 0
      %396 = vmatprep.subr.bf16.mxu0 0
      %397 = vmatpush1.bf16.msra.mxu0 0
      %398 = vmatprep.subr.bf16.mxu0 0
      %399 = vmatpush1.bf16.msra.mxu0 0
      %400 = vmatprep.subr.bf16.mxu0 0
      %401 = vmatpush1.bf16.msra.mxu0 0
      %402 = vmatprep.subr.bf16.mxu0 0
      %403 = vmatpush1.bf16.msra.mxu0 0
      %404 = vmatprep.subr.bf16.mxu0 0
      %405 = vmatpush1.bf16.msra.mxu0 0
      %406 = vmatprep.subr.bf16.mxu0 0
      %407 = vmatpush1.bf16.msra.mxu0 0
      %408 = vmatprep.subr.bf16.mxu0 0
      %409 = vmatpush1.bf16.msra.mxu0 0
      %410 = vmatprep.subr.bf16.mxu0 0
      %411 = vmatpush1.bf16.msra.mxu0 0
      %412 = vmatprep.subr.bf16.mxu0 0
      %413 = vmatpush1.bf16.msra.mxu0 0
      %414 = vmatprep.subr.bf16.mxu0 0
      %415 = vmatpush1.bf16.msra.mxu0 0
      %416 = vmatprep.subr.bf16.mxu0 0
      %417 = vmatpush1.bf16.msra.mxu0 0
      %418 = vmatprep.subr.bf16.mxu0 0
      %419 = vmatpush1.bf16.msra.mxu0 0
      %420 = vmatprep.subr.bf16.mxu0 0
      %421 = vmatpush1.bf16.msra.mxu0 0
      %422 = vmatprep.subr.bf16.mxu0 0
      %423 = vmatpush1.bf16.msra.mxu0 0
      %424 = vmatprep.mubr.bf16.mxu0 0
      %425 = vmatmul.mubr.bf16.gmra.mrb[0].mxu0 %v341
      %v426 = vpop.f32.mrb[0].mxu0
      %v427 = vadd.f32 %v337, %v426
      %v428 = vpop.f32.mrb[0].mxu0
      %v429 = vpop.f32.mrb[0].mxu0
      %v430 = vadd.f32 %v337, %v429
      %v431 = vpop.f32.mrb[0].mxu0
      %432 = vmatprep.mubr.bf16.mxu0 0
      %433 = vmatmul.mubr.bf16.gmra.mrb[0].mxu0 %v344
      %v434 = vpop.f32.mrb[0].mxu0
      %v435 = vadd.f32 %v337, %v434
      %v436 = vpop.f32.mrb[0].mxu0
      %v437 = vpop.f32.mrb[0].mxu0
      %v438 = vadd.f32 %v337, %v437
      %v439 = vpop.f32.mrb[0].mxu0
      %440 = vmatprep.mubr.bf16.mxu0 0
      %441 = vmatmul.mubr.bf16.gmra.mrb[0].mxu0 %v347
      %v442 = vpop.f32.mrb[0].mxu0
      %v443 = vadd.f32 %v337, %v442
      %v444 = vpop.f32.mrb[0].mxu0
      %v445 = vpop.f32.mrb[0].mxu0
      %v446 = vadd.f32 %v337, %v445
      %v447 = vpop.f32.mrb[0].mxu0
      %448 = vmatprep.mubr.bf16.mxu0 0
      %449 = vmatmul.mubr.bf16.gmra.mrb[0].mxu0 %v350
      %v450 = vpop.f32.mrb[0].mxu0
      %v451 = vadd.f32 %v337, %v450
      %v452 = vpop.f32.mrb[0].mxu0
      %v453 = vpop.f32.mrb[0].mxu0
      %v454 = vadd.f32 %v337, %v453
      %v455 = vpop.f32.mrb[0].mxu0
      %456 = vmatprep.mubr.bf16.mxu0 0
      %457 = vmatmul.mubr.bf16.gmra.mrb[0].mxu0 %v353
      %v458 = vpop.f32.mrb[0].mxu0
      %v459 = vadd.f32 %v337, %v458
      %v460 = vpop.f32.mrb[0].mxu0
      %v461 = vpop.f32.mrb[0].mxu0
      %v462 = vadd.f32 %v337, %v461
      %v463 = vpop.f32.mrb[0].mxu0
      %464 = vmatprep.mubr.bf16.mxu0 0
      %465 = vmatmul.mubr.bf16.gmra.mrb[0].mxu0 %v356
      %v466 = vpop.f32.mrb[0].mxu0
      %v467 = vadd.f32 %v337, %v466
      %v468 = vpop.f32.mrb[0].mxu0
      %v469 = vpop.f32.mrb[0].mxu0
      %v470 = vadd.f32 %v337, %v469
      %v471 = vpop.f32.mrb[0].mxu0
      %472 = vmatprep.mubr.bf16.mxu0 0
      %473 = vmatmul.mubr.bf16.gmra.mrb[0].mxu0 %v359
      %v474 = vpop.f32.mrb[0].mxu0
      %v475 = vadd.f32 %v337, %v474
      %v476 = vpop.f32.mrb[0].mxu0
      %v477 = vpop.f32.mrb[0].mxu0
      %v478 = vadd.f32 %v337, %v477
      %v479 = vpop.f32.mrb[0].mxu0
      %480 = vmatprep.mubr.bf16.mxu0 0
      %481 = vmatmul.mubr.bf16.gmra.mrb[0].mxu0 %v362
      %v482 = vpop.f32.mrb[0].mxu0
      %v483 = vadd.f32 %v337, %v482
      %v484 = vpop.f32.mrb[0].mxu0
      %v485 = vpop.f32.mrb[0].mxu0
      %v486 = vadd.f32 %v337, %v485
      %v487 = vpop.f32.mrb[0].mxu0
      %488 = vmatprep.mubr.bf16.mxu0 0
      %489 = vmatmul.mubr.bf16.gmra.mrb[0].mxu0 %v365
      %v490 = vpop.f32.mrb[0].mxu0
      %v491 = vadd.f32 %v337, %v490
      %v492 = vpop.f32.mrb[0].mxu0
      %v493 = vpop.f32.mrb[0].mxu0
      %v494 = vadd.f32 %v337, %v493
      %v495 = vpop.f32.mrb[0].mxu0
      %496 = vmatprep.mubr.bf16.mxu0 0
      %497 = vmatmul.mubr.bf16.gmra.mrb[0].mxu0 %v368
      %v498 = vpop.f32.mrb[0].mxu0
      %v499 = vadd.f32 %v337, %v498
      %v500 = vpop.f32.mrb[0].mxu0
      %v501 = vpop.f32.mrb[0].mxu0
      %v502 = vadd.f32 %v337, %v501
      %v503 = vpop.f32.mrb[0].mxu0
      %504 = vmatprep.mubr.bf16.mxu0 0
      %505 = vmatmul.mubr.bf16.gmra.mrb[0].mxu0 %v371
      %v506 = vpop.f32.mrb[0].mxu0
      %v507 = vadd.f32 %v337, %v506
      %v508 = vpop.f32.mrb[0].mxu0
      %v509 = vpop.f32.mrb[0].mxu0
      %v510 = vadd.f32 %v337, %v509
      %v511 = vpop.f32.mrb[0].mxu0
      %512 = vmatprep.mubr.bf16.mxu0 0
      %513 = vmatmul.mubr.bf16.gmra.mrb[0].mxu0 %v374
      %v514 = vpop.f32.mrb[0].mxu0
      %v515 = vadd.f32 %v337, %v514
      %v516 = vpop.f32.mrb[0].mxu0
      %v517 = vpop.f32.mrb[0].mxu0
      %v518 = vadd.f32 %v337, %v517
      %v519 = vpop.f32.mrb[0].mxu0
      %520 = vmatprep.mubr.bf16.mxu0 0
      %521 = vmatmul.mubr.bf16.gmra.mrb[0].mxu0 %v377
      %v522 = vpop.f32.mrb[0].mxu0
      %v523 = vadd.f32 %v337, %v522
      %v524 = vpop.f32.mrb[0].mxu0
      %v525 = vpop.f32.mrb[0].mxu0
      %v526 = vadd.f32 %v337, %v525
      %v527 = vpop.f32.mrb[0].mxu0
      %528 = vmatprep.mubr.bf16.mxu0 0
      %529 = vmatmul.mubr.bf16.gmra.mrb[0].mxu0 %v380
      %v530 = vpop.f32.mrb[0].mxu0
      %v531 = vadd.f32 %v337, %v530
      %v532 = vpop.f32.mrb[0].mxu0
      %v533 = vpop.f32.mrb[0].mxu0
      %v534 = vadd.f32 %v337, %v533
      %v535 = vpop.f32.mrb[0].mxu0
      %536 = vmatprep.mubr.bf16.mxu0 0
      %537 = vmatmul.mubr.bf16.gmra.mrb[0].mxu0 %v383
      %v538 = vpop.f32.mrb[0].mxu0
      %v539 = vadd.f32 %v337, %v538
      %v540 = vpop.f32.mrb[0].mxu0
      %v541 = vpop.f32.mrb[0].mxu0
      %v542 = vadd.f32 %v337, %v541
      %v543 = vpop.f32.mrb[0].mxu0
      %544 = vmatprep.mubr.bf16.mxu0 0
      %545 = vmatmul.mubr.bf16.gmra.mrb[0].mxu0 %v386
      %v546 = vpop.f32.mrb[0].mxu0
      %v547 = vadd.f32 %v337, %v546
      %v548 = vpop.f32.mrb[0].mxu0
      %v549 = vpop.f32.mrb[0].mxu0
      %v550 = vadd.f32 %v337, %v549
      %v551 = vpop.f32.mrb[0].mxu0
      %552 = vdwg.mxu0
      %v553 = vmax.f32 %v427, 0.0
      %v554 = vmax.f32 %v430, 0.0
      %v555 = vmax.f32 %v435, 0.0
      %v556 = vmax.f32 %v438, 0.0
      %v557 = vmax.f32 %v443, 0.0
      %v558 = vmax.f32 %v446, 0.0
      %v559 = vmax.f32 %v451, 0.0
      %v560 = vmax.f32 %v454, 0.0
      %v561 = vmax.f32 %v459, 0.0
      %v562 = vmax.f32 %v462, 0.0
      %v563 = vmax.f32 %v467, 0.0
      %v564 = vmax.f32 %v470, 0.0
      %v565 = vmax.f32 %v475, 0.0
      %v566 = vmax.f32 %v478, 0.0
      %v567 = vmax.f32 %v483, 0.0
      %v568 = vmax.f32 %v486, 0.0
      %v569 = vmax.f32 %v491, 0.0
      %v570 = vmax.f32 %v494, 0.0
      %v571 = vmax.f32 %v499, 0.0
      %v572 = vmax.f32 %v502, 0.0
      %v573 = vmax.f32 %v507, 0.0
      %v574 = vmax.f32 %v510, 0.0
      %v575 = vmax.f32 %v515, 0.0
      %v576 = vmax.f32 %v518, 0.0
      %v577 = vmax.f32 %v523, 0.0
      %v578 = vmax.f32 %v526, 0.0
      %v579 = vmax.f32 %v531, 0.0
      %v580 = vmax.f32 %v534, 0.0
      %v581 = vmax.f32 %v539, 0.0
      %v582 = vmax.f32 %v542, 0.0
      %v583 = vmax.f32 %v547, 0.0
      %v584 = vmax.f32 %v550, 0.0
      %v585 = vpack.c.bf16 %v554, %v553
      %v586 = vpack.c.bf16 %v556, %v555
      %v587 = vpack.c.bf16 %v558, %v557
      %v588 = vpack.c.bf16 %v560, %v559
      %v589 = vpack.c.bf16 %v562, %v561
      %v590 = vpack.c.bf16 %v564, %v563
      %v591 = vpack.c.bf16 %v566, %v565
      %v592 = vpack.c.bf16 %v568, %v567
      %v593 = vpack.c.bf16 %v570, %v569
      %v594 = vpack.c.bf16 %v572, %v571
      %v595 = vpack.c.bf16 %v574, %v573
      %v596 = vpack.c.bf16 %v576, %v575
      %v597 = vpack.c.bf16 %v578, %v577
      %v598 = vpack.c.bf16 %v580, %v579
      %v599 = vpack.c.bf16 %v582, %v581
      %v600 = vpack.c.bf16 %v584, %v583
      %v601 = vld [vmem:[%s3] sm:$0xf]
      %v602 = vld [vmem:[%s3 + $0x4] sm:$0xf]
      %v603 = vld [vmem:[%s3 + $0x8] sm:$0xf]
      %v604 = vld [vmem:[%s3 + $0xc] sm:$0xf]
      %v605 = vld [vmem:[%s3 + $0x10] sm:$0xf]
      %v606 = vld [vmem:[%s3 + $0x14] sm:$0xf]
      %v607 = vld [vmem:[%s3 + $0x18] sm:$0xf]
      %v608 = vld [vmem:[%s3 + $0x1c] sm:$0xf]
      %v609 = vld [vmem:[%s3 + $0x20] sm:$0xf]
      %v610 = vld [vmem:[%s3 + $0x24] sm:$0xf]
      %v611 = vld [vmem:[%s3 + $0x28] sm:$0xf]
      %v612 = vld [vmem:[%s3 + $0x2c] sm:$0xf]
      %v613 = vld [vmem:[%s3 + $0x30] sm:$0xf]
      %v614 = vld [vmem:[%s3 + $0x34] sm:$0xf]
      %v615 = vld [vmem:[%s3 + $0x38] sm:$0xf]
      %v616 = vld [vmem:[%s3 + $0x3c] sm:$0xf]
      %v617 = vld [vmem:[%s4] sm:$0x1]
      %v619 = vlaneseq
      %v620 = vshrl.u32 %v619, 7
      %v621 = vsub.s32 0, %v620
      %v622 = vrot.slane %v617, %v621
      %v640 = vunpack.c.l.b16 %v601
      %v641 = vunpack.c.l.b16 %v602
      %v642 = vunpack.c.l.b16 %v603
      %v643 = vunpack.c.l.b16 %v604
      %v644 = vunpack.c.l.b16 %v605
      %v645 = vunpack.c.l.b16 %v606
      %v646 = vunpack.c.l.b16 %v607
      %v647 = vunpack.c.l.b16 %v608
      %v648 = vunpack.c.l.b16 %v609
      %v649 = vunpack.c.l.b16 %v610
      %v650 = vunpack.c.l.b16 %v611
      %v651 = vunpack.c.l.b16 %v612
      %v652 = vunpack.c.l.b16 %v613
      %v653 = vunpack.c.l.b16 %v614
      %v654 = vunpack.c.l.b16 %v615
      %v655 = vunpack.c.l.b16 %v616
      %v656 = vpack.c.b16 %v641, %v640
      %v657 = vpack.c.b16 %v643, %v642
      %v658 = vpack.c.b16 %v645, %v644
      %v659 = vpack.c.b16 %v647, %v646
      %v660 = vpack.c.b16 %v649, %v648
      %v661 = vpack.c.b16 %v651, %v650
      %v662 = vpack.c.b16 %v653, %v652
      %v663 = vpack.c.b16 %v655, %v654
      %672 = vmatprep.subr.bf16.mxu0 0
      %673 = vmatpush1.bf16.msra.mxu0 %v656
      %674 = vmatprep.subr.bf16.mxu0 0
      %675 = vmatpush1.bf16.msra.mxu0 %v657
      %676 = vmatprep.subr.bf16.mxu0 0
      %677 = vmatpush1.bf16.msra.mxu0 %v658
      %678 = vmatprep.subr.bf16.mxu0 0
      %679 = vmatpush1.bf16.msra.mxu0 %v659
      %680 = vmatprep.subr.bf16.mxu0 0
      %681 = vmatpush1.bf16.msra.mxu0 %v660
      %682 = vmatprep.subr.bf16.mxu0 0
      %683 = vmatpush1.bf16.msra.mxu0 %v661
      %684 = vmatprep.subr.bf16.mxu0 0
      %685 = vmatpush1.bf16.msra.mxu0 %v662
      %686 = vmatprep.subr.bf16.mxu0 0
      %687 = vmatpush1.bf16.msra.mxu0 %v663
      %688 = vmatprep.subr.bf16.mxu0 0
      %689 = vmatpush1.bf16.msra.mxu0 0
      %690 = vmatprep.subr.bf16.mxu0 0
      %691 = vmatpush1.bf16.msra.mxu0 0
      %692 = vmatprep.subr.bf16.mxu0 0
      %693 = vmatpush1.bf16.msra.mxu0 0
      %694 = vmatprep.subr.bf16.mxu0 0
      %695 = vmatpush1.bf16.msra.mxu0 0
      %696 = vmatprep.subr.bf16.mxu0 0
      %697 = vmatpush1.bf16.msra.mxu0 0
      %698 = vmatprep.subr.bf16.mxu0 0
      %699 = vmatpush1.bf16.msra.mxu0 0
      %700 = vmatprep.subr.bf16.mxu0 0
      %701 = vmatpush1.bf16.msra.mxu0 0
      %702 = vmatprep.subr.bf16.mxu0 0
      %703 = vmatpush1.bf16.msra.mxu0 0
      %704 = vmatprep.mubr.bf16.mxu0 0
      %705 = vmatmul.mubr.bf16.gmra.mrb[0].mxu0 %v585
      %v706 = vpop.f32.mrb[0].mxu0
      %v707 = vadd.f32 %v622, %v706
      %v708 = vpop.f32.mrb[0].mxu0
      %v709 = vpop.f32.mrb[0].mxu0
      %v710 = vadd.f32 %v622, %v709
      %v711 = vpop.f32.mrb[0].mxu0
      %712 = vmatprep.mubr.bf16.mxu0 0
      %713 = vmatmul.mubr.bf16.gmra.mrb[0].mxu0 %v586
      %v714 = vpop.f32.mrb[0].mxu0
      %v715 = vadd.f32 %v622, %v714
      %v716 = vpop.f32.mrb[0].mxu0
      %v717 = vpop.f32.mrb[0].mxu0
      %v718 = vadd.f32 %v622, %v717
      %v719 = vpop.f32.mrb[0].mxu0
      %720 = vmatprep.mubr.bf16.mxu0 0
      %721 = vmatmul.mubr.bf16.gmra.mrb[0].mxu0 %v587
      %v722 = vpop.f32.mrb[0].mxu0
      %v723 = vadd.f32 %v622, %v722
      %v724 = vpop.f32.mrb[0].mxu0
      %v725 = vpop.f32.mrb[0].mxu0
      %v726 = vadd.f32 %v622, %v725
      %v727 = vpop.f32.mrb[0].mxu0
      %728 = vmatprep.mubr.bf16.mxu0 0
      %729 = vmatmul.mubr.bf16.gmra.mrb[0].mxu0 %v588
      %v730 = vpop.f32.mrb[0].mxu0
      %v731 = vadd.f32 %v622, %v730
      %v732 = vpop.f32.mrb[0].mxu0
      %v733 = vpop.f32.mrb[0].mxu0
      %v734 = vadd.f32 %v622, %v733
      %v735 = vpop.f32.mrb[0].mxu0
      %736 = vmatprep.mubr.bf16.mxu0 0
      %737 = vmatmul.mubr.bf16.gmra.mrb[0].mxu0 %v589
      %v738 = vpop.f32.mrb[0].mxu0
      %v739 = vadd.f32 %v622, %v738
      %v740 = vpop.f32.mrb[0].mxu0
      %v741 = vpop.f32.mrb[0].mxu0
      %v742 = vadd.f32 %v622, %v741
      %v743 = vpop.f32.mrb[0].mxu0
      %744 = vmatprep.mubr.bf16.mxu0 0
      %745 = vmatmul.mubr.bf16.gmra.mrb[0].mxu0 %v590
      %v746 = vpop.f32.mrb[0].mxu0
      %v747 = vadd.f32 %v622, %v746
      %v748 = vpop.f32.mrb[0].mxu0
      %v749 = vpop.f32.mrb[0].mxu0
      %v750 = vadd.f32 %v622, %v749
      %v751 = vpop.f32.mrb[0].mxu0
      %752 = vmatprep.mubr.bf16.mxu0 0
      %753 = vmatmul.mubr.bf16.gmra.mrb[0].mxu0 %v591
      %v754 = vpop.f32.mrb[0].mxu0
      %v755 = vadd.f32 %v622, %v754
      %v756 = vpop.f32.mrb[0].mxu0
      %v757 = vpop.f32.mrb[0].mxu0
      %v758 = vadd.f32 %v622, %v757
      %v759 = vpop.f32.mrb[0].mxu0
      %760 = vmatprep.mubr.bf16.mxu0 0
      %761 = vmatmul.mubr.bf16.gmra.mrb[0].mxu0 %v592
      %v762 = vpop.f32.mrb[0].mxu0
      %v763 = vadd.f32 %v622, %v762
      %v764 = vpop.f32.mrb[0].mxu0
      %v765 = vpop.f32.mrb[0].mxu0
      %v766 = vadd.f32 %v622, %v765
      %v767 = vpop.f32.mrb[0].mxu0
      %768 = vmatprep.mubr.bf16.mxu0 0
      %769 = vmatmul.mubr.bf16.gmra.mrb[0].mxu0 %v593
      %v770 = vpop.f32.mrb[0].mxu0
      %v771 = vadd.f32 %v622, %v770
      %v772 = vpop.f32.mrb[0].mxu0
      %v773 = vpop.f32.mrb[0].mxu0
      %v774 = vadd.f32 %v622, %v773
      %v775 = vpop.f32.mrb[0].mxu0
      %776 = vmatprep.mubr.bf16.mxu0 0
      %777 = vmatmul.mubr.bf16.gmra.mrb[0].mxu0 %v594
      %v778 = vpop.f32.mrb[0].mxu0
      %v779 = vadd.f32 %v622, %v778
      %v780 = vpop.f32.mrb[0].mxu0
      %v781 = vpop.f32.mrb[0].mxu0
      %v782 = vadd.f32 %v622, %v781
      %v783 = vpop.f32.mrb[0].mxu0
      %784 = vmatprep.mubr.bf16.mxu0 0
      %785 = vmatmul.mubr.bf16.gmra.mrb[0].mxu0 %v595
      %v786 = vpop.f32.mrb[0].mxu0
      %v787 = vadd.f32 %v622, %v786
      %v788 = vpop.f32.mrb[0].mxu0
      %v789 = vpop.f32.mrb[0].mxu0
      %v790 = vadd.f32 %v622, %v789
      %v791 = vpop.f32.mrb[0].mxu0
      %792 = vmatprep.mubr.bf16.mxu0 0
      %793 = vmatmul.mubr.bf16.gmra.mrb[0].mxu0 %v596
      %v794 = vpop.f32.mrb[0].mxu0
      %v795 = vadd.f32 %v622, %v794
      %v796 = vpop.f32.mrb[0].mxu0
      %v797 = vpop.f32.mrb[0].mxu0
      %v798 = vadd.f32 %v622, %v797
      %v799 = vpop.f32.mrb[0].mxu0
      %800 = vmatprep.mubr.bf16.mxu0 0
      %801 = vmatmul.mubr.bf16.gmra.mrb[0].mxu0 %v597
      %v802 = vpop.f32.mrb[0].mxu0
      %v803 = vadd.f32 %v622, %v802
      %v804 = vpop.f32.mrb[0].mxu0
      %v805 = vpop.f32.mrb[0].mxu0
      %v806 = vadd.f32 %v622, %v805
      %v807 = vpop.f32.mrb[0].mxu0
      %808 = vmatprep.mubr.bf16.mxu0 0
      %809 = vmatmul.mubr.bf16.gmra.mrb[0].mxu0 %v598
      %v810 = vpop.f32.mrb[0].mxu0
      %v811 = vadd.f32 %v622, %v810
      %v812 = vpop.f32.mrb[0].mxu0
      %v813 = vpop.f32.mrb[0].mxu0
      %v814 = vadd.f32 %v622, %v813
      %v815 = vpop.f32.mrb[0].mxu0
      %816 = vmatprep.mubr.bf16.mxu0 0
      %817 = vmatmul.mubr.bf16.gmra.mrb[0].mxu0 %v599
      %v818 = vpop.f32.mrb[0].mxu0
      %v819 = vadd.f32 %v622, %v818
      %v820 = vpop.f32.mrb[0].mxu0
      %v821 = vpop.f32.mrb[0].mxu0
      %v822 = vadd.f32 %v622, %v821
      %v823 = vpop.f32.mrb[0].mxu0
      %824 = vmatprep.mubr.bf16.mxu0 0
      %825 = vmatmul.mubr.bf16.gmra.mrb[0].mxu0 %v600
      %v826 = vpop.f32.mrb[0].mxu0
      %v827 = vadd.f32 %v622, %v826
      %v828 = vpop.f32.mrb[0].mxu0
      %v829 = vpop.f32.mrb[0].mxu0
      %v830 = vadd.f32 %v622, %v829
      %v831 = vpop.f32.mrb[0].mxu0
      %832 = vdwg.mxu0
      %v833 = vmax.f32 %v707, 0.0
      %v834 = vmax.f32 %v710, 0.0
      %v835 = vmax.f32 %v715, 0.0
      %v836 = vmax.f32 %v718, 0.0
      %v837 = vmax.f32 %v723, 0.0
      %v838 = vmax.f32 %v726, 0.0
      %v839 = vmax.f32 %v731, 0.0
      %v840 = vmax.f32 %v734, 0.0
      %v841 = vmax.f32 %v739, 0.0
      %v842 = vmax.f32 %v742, 0.0
      %v843 = vmax.f32 %v747, 0.0
      %v844 = vmax.f32 %v750, 0.0
      %v845 = vmax.f32 %v755, 0.0
      %v846 = vmax.f32 %v758, 0.0
      %v847 = vmax.f32 %v763, 0.0
      %v848 = vmax.f32 %v766, 0.0
      %v849 = vmax.f32 %v771, 0.0
      %v850 = vmax.f32 %v774, 0.0
      %v851 = vmax.f32 %v779, 0.0
      %v852 = vmax.f32 %v782, 0.0
      %v853 = vmax.f32 %v787, 0.0
      %v854 = vmax.f32 %v790, 0.0
      %v855 = vmax.f32 %v795, 0.0
      %v856 = vmax.f32 %v798, 0.0
      %v857 = vmax.f32 %v803, 0.0
      %v858 = vmax.f32 %v806, 0.0
      %v859 = vmax.f32 %v811, 0.0
      %v860 = vmax.f32 %v814, 0.0
      %v861 = vmax.f32 %v819, 0.0
      %v862 = vmax.f32 %v822, 0.0
      %v863 = vmax.f32 %v827, 0.0
      %v864 = vmax.f32 %v830, 0.0
      %v865 = vpack.c.bf16 %v834, %v833
      %v866 = vpack.c.bf16 %v836, %v835
      %v867 = vpack.c.bf16 %v838, %v837
      %v868 = vpack.c.bf16 %v840, %v839
      %v869 = vpack.c.bf16 %v842, %v841
      %v870 = vpack.c.bf16 %v844, %v843
      %v871 = vpack.c.bf16 %v846, %v845
      %v872 = vpack.c.bf16 %v848, %v847
      %v873 = vpack.c.bf16 %v850, %v849
      %v874 = vpack.c.bf16 %v852, %v851
      %v875 = vpack.c.bf16 %v854, %v853
      %v876 = vpack.c.bf16 %v856, %v855
      %v877 = vpack.c.bf16 %v858, %v857
      %v878 = vpack.c.bf16 %v860, %v859
      %v879 = vpack.c.bf16 %v862, %v861
      %v880 = vpack.c.bf16 %v864, %v863
      %v881 = vld [vmem:[%s5] sm:$0xf]
      %v882 = vld [vmem:[%s5 + $0x4] sm:$0xf]
      %v883 = vld [vmem:[%s5 + $0x8] sm:$0xf]
      %v884 = vld [vmem:[%s5 + $0xc] sm:$0xf]
      %v885 = vld [vmem:[%s5 + $0x10] sm:$0xf]
      %v886 = vld [vmem:[%s5 + $0x14] sm:$0xf]
      %v887 = vld [vmem:[%s5 + $0x18] sm:$0xf]
      %v888 = vld [vmem:[%s5 + $0x1c] sm:$0xf]
      %v889 = vld [vmem:[%s5 + $0x20] sm:$0xf]
      %v890 = vld [vmem:[%s5 + $0x24] sm:$0xf]
      %v891 = vld [vmem:[%s5 + $0x28] sm:$0xf]
      %v892 = vld [vmem:[%s5 + $0x2c] sm:$0xf]
      %v893 = vld [vmem:[%s5 + $0x30] sm:$0xf]
      %v894 = vld [vmem:[%s5 + $0x34] sm:$0xf]
      %v895 = vld [vmem:[%s5 + $0x38] sm:$0xf]
      %v896 = vld [vmem:[%s5 + $0x3c] sm:$0xf]
      %v897 = vld [vmem:[%s6] sm:$0x1]
      %v899 = vlaneseq
      %v900 = vshrl.u32 %v899, 7
      %v901 = vsub.s32 0, %v900
      %v902 = vrot.slane %v897, %v901
      %v920 = vunpack.c.l.b16 %v881
      %v921 = vunpack.c.l.b16 %v882
      %v922 = vunpack.c.l.b16 %v883
      %v923 = vunpack.c.l.b16 %v884
      %v924 = vunpack.c.l.b16 %v885
      %v925 = vunpack.c.l.b16 %v886
      %v926 = vunpack.c.l.b16 %v887
      %v927 = vunpack.c.l.b16 %v888
      %v928 = vunpack.c.l.b16 %v889
      %v929 = vunpack.c.l.b16 %v890
      %v930 = vunpack.c.l.b16 %v891
      %v931 = vunpack.c.l.b16 %v892
      %v932 = vunpack.c.l.b16 %v893
      %v933 = vunpack.c.l.b16 %v894
      %v934 = vunpack.c.l.b16 %v895
      %v935 = vunpack.c.l.b16 %v896
      %v936 = vpack.c.b16 %v921, %v920
      %v937 = vpack.c.b16 %v923, %v922
      %v938 = vpack.c.b16 %v925, %v924
      %v939 = vpack.c.b16 %v927, %v926
      %v940 = vpack.c.b16 %v929, %v928
      %v941 = vpack.c.b16 %v931, %v930
      %v942 = vpack.c.b16 %v933, %v932
      %v943 = vpack.c.b16 %v935, %v934
      %952 = vmatprep.subr.bf16.mxu0 0
      %953 = vmatpush1.bf16.msra.mxu0 %v936
      %954 = vmatprep.subr.bf16.mxu0 0
      %955 = vmatpush1.bf16.msra.mxu0 %v937
      %956 = vmatprep.subr.bf16.mxu0 0
      %957 = vmatpush1.bf16.msra.mxu0 %v938
      %958 = vmatprep.subr.bf16.mxu0 0
      %959 = vmatpush1.bf16.msra.mxu0 %v939
      %960 = vmatprep.subr.bf16.mxu0 0
      %961 = vmatpush1.bf16.msra.mxu0 %v940
      %962 = vmatprep.subr.bf16.mxu0 0
      %963 = vmatpush1.bf16.msra.mxu0 %v941
      %964 = vmatprep.subr.bf16.mxu0 0
      %965 = vmatpush1.bf16.msra.mxu0 %v942
      %966 = vmatprep.subr.bf16.mxu0 0
      %967 = vmatpush1.bf16.msra.mxu0 %v943
      %968 = vmatprep.subr.bf16.mxu0 0
      %969 = vmatpush1.bf16.msra.mxu0 0
      %970 = vmatprep.subr.bf16.mxu0 0
      %971 = vmatpush1.bf16.msra.mxu0 0
      %972 = vmatprep.subr.bf16.mxu0 0
      %973 = vmatpush1.bf16.msra.mxu0 0
      %974 = vmatprep.subr.bf16.mxu0 0
      %975 = vmatpush1.bf16.msra.mxu0 0
      %976 = vmatprep.subr.bf16.mxu0 0
      %977 = vmatpush1.bf16.msra.mxu0 0
      %978 = vmatprep.subr.bf16.mxu0 0
      %979 = vmatpush1.bf16.msra.mxu0 0
      %980 = vmatprep.subr.bf16.mxu0 0
      %981 = vmatpush1.bf16.msra.mxu0 0
      %982 = vmatprep.subr.bf16.mxu0 0
      %983 = vmatpush1.bf16.msra.mxu0 0
      %984 = vmatprep.mubr.bf16.mxu0 0
      %985 = vmatmul.mubr.bf16.gmra.mrb[0].mxu0 %v865
      %v986 = vpop.f32.mrb[0].mxu0
      %v987 = vadd.f32 %v902, %v986
      %v988 = vpop.f32.mrb[0].mxu0
      %v989 = vpop.f32.mrb[0].mxu0
      %v990 = vadd.f32 %v902, %v989
      %v991 = vpop.f32.mrb[0].mxu0
      %992 = vmatprep.mubr.bf16.mxu0 0
      %993 = vmatmul.mubr.bf16.gmra.mrb[0].mxu0 %v866
      %v994 = vpop.f32.mrb[0].mxu0
      %v995 = vadd.f32 %v902, %v994
      %v996 = vpop.f32.mrb[0].mxu0
      %v997 = vpop.f32.mrb[0].mxu0
      %v998 = vadd.f32 %v902, %v997
      %v999 = vpop.f32.mrb[0].mxu0
      %1000 = vmatprep.mubr.bf16.mxu0 0
      %1001 = vmatmul.mubr.bf16.gmra.mrb[0].mxu0 %v867
      %v1002 = vpop.f32.mrb[0].mxu0
      %v1003 = vadd.f32 %v902, %v1002
      %v1004 = vpop.f32.mrb[0].mxu0
      %v1005 = vpop.f32.mrb[0].mxu0
      %v1006 = vadd.f32 %v902, %v1005
      %v1007 = vpop.f32.mrb[0].mxu0
      %1008 = vmatprep.mubr.bf16.mxu0 0
      %1009 = vmatmul.mubr.bf16.gmra.mrb[0].mxu0 %v868
      %v1010 = vpop.f32.mrb[0].mxu0
      %v1011 = vadd.f32 %v902, %v1010
      %v1012 = vpop.f32.mrb[0].mxu0
      %v1013 = vpop.f32.mrb[0].mxu0
      %v1014 = vadd.f32 %v902, %v1013
      %v1015 = vpop.f32.mrb[0].mxu0
      %1016 = vmatprep.mubr.bf16.mxu0 0
      %1017 = vmatmul.mubr.bf16.gmra.mrb[0].mxu0 %v869
      %v1018 = vpop.f32.mrb[0].mxu0
      %v1019 = vadd.f32 %v902, %v1018
      %v1020 = vpop.f32.mrb[0].mxu0
      %v1021 = vpop.f32.mrb[0].mxu0
      %v1022 = vadd.f32 %v902, %v1021
      %v1023 = vpop.f32.mrb[0].mxu0
      %1024 = vmatprep.mubr.bf16.mxu0 0
      %1025 = vmatmul.mubr.bf16.gmra.mrb[0].mxu0 %v870
      %v1026 = vpop.f32.mrb[0].mxu0
      %v1027 = vadd.f32 %v902, %v1026
      %v1028 = vpop.f32.mrb[0].mxu0
      %v1029 = vpop.f32.mrb[0].mxu0
      %v1030 = vadd.f32 %v902, %v1029
      %v1031 = vpop.f32.mrb[0].mxu0
      %1032 = vmatprep.mubr.bf16.mxu0 0
      %1033 = vmatmul.mubr.bf16.gmra.mrb[0].mxu0 %v871
      %v1034 = vpop.f32.mrb[0].mxu0
      %v1035 = vadd.f32 %v902, %v1034
      %v1036 = vpop.f32.mrb[0].mxu0
      %v1037 = vpop.f32.mrb[0].mxu0
      %v1038 = vadd.f32 %v902, %v1037
      %v1039 = vpop.f32.mrb[0].mxu0
      %1040 = vmatprep.mubr.bf16.mxu0 0
      %1041 = vmatmul.mubr.bf16.gmra.mrb[0].mxu0 %v872
      %v1042 = vpop.f32.mrb[0].mxu0
      %v1043 = vadd.f32 %v902, %v1042
      %v1044 = vpop.f32.mrb[0].mxu0
      %v1045 = vpop.f32.mrb[0].mxu0
      %v1046 = vadd.f32 %v902, %v1045
      %v1047 = vpop.f32.mrb[0].mxu0
      %1048 = vmatprep.mubr.bf16.mxu0 0
      %1049 = vmatmul.mubr.bf16.gmra.mrb[0].mxu0 %v873
      %v1050 = vpop.f32.mrb[0].mxu0
      %v1051 = vadd.f32 %v902, %v1050
      %v1052 = vpop.f32.mrb[0].mxu0
      %v1053 = vpop.f32.mrb[0].mxu0
      %v1054 = vadd.f32 %v902, %v1053
      %v1055 = vpop.f32.mrb[0].mxu0
      %1056 = vmatprep.mubr.bf16.mxu0 0
      %1057 = vmatmul.mubr.bf16.gmra.mrb[0].mxu0 %v874
      %v1058 = vpop.f32.mrb[0].mxu0
      %v1059 = vadd.f32 %v902, %v1058
      %v1060 = vpop.f32.mrb[0].mxu0
      %v1061 = vpop.f32.mrb[0].mxu0
      %v1062 = vadd.f32 %v902, %v1061
      %v1063 = vpop.f32.mrb[0].mxu0
      %1064 = vmatprep.mubr.bf16.mxu0 0
      %1065 = vmatmul.mubr.bf16.gmra.mrb[0].mxu0 %v875
      %v1066 = vpop.f32.mrb[0].mxu0
      %v1067 = vadd.f32 %v902, %v1066
      %v1068 = vpop.f32.mrb[0].mxu0
      %v1069 = vpop.f32.mrb[0].mxu0
      %v1070 = vadd.f32 %v902, %v1069
      %v1071 = vpop.f32.mrb[0].mxu0
      %1072 = vmatprep.mubr.bf16.mxu0 0
      %1073 = vmatmul.mubr.bf16.gmra.mrb[0].mxu0 %v876
      %v1074 = vpop.f32.mrb[0].mxu0
      %v1075 = vadd.f32 %v902, %v1074
      %v1076 = vpop.f32.mrb[0].mxu0
      %v1077 = vpop.f32.mrb[0].mxu0
      %v1078 = vadd.f32 %v902, %v1077
      %v1079 = vpop.f32.mrb[0].mxu0
      %1080 = vmatprep.mubr.bf16.mxu0 0
      %1081 = vmatmul.mubr.bf16.gmra.mrb[0].mxu0 %v877
      %v1082 = vpop.f32.mrb[0].mxu0
      %v1083 = vadd.f32 %v902, %v1082
      %v1084 = vpop.f32.mrb[0].mxu0
      %v1085 = vpop.f32.mrb[0].mxu0
      %v1086 = vadd.f32 %v902, %v1085
      %v1087 = vpop.f32.mrb[0].mxu0
      %1088 = vmatprep.mubr.bf16.mxu0 0
      %1089 = vmatmul.mubr.bf16.gmra.mrb[0].mxu0 %v878
      %v1090 = vpop.f32.mrb[0].mxu0
      %v1091 = vadd.f32 %v902, %v1090
      %v1092 = vpop.f32.mrb[0].mxu0
      %v1093 = vpop.f32.mrb[0].mxu0
      %v1094 = vadd.f32 %v902, %v1093
      %v1095 = vpop.f32.mrb[0].mxu0
      %1096 = vmatprep.mubr.bf16.mxu0 0
      %1097 = vmatmul.mubr.bf16.gmra.mrb[0].mxu0 %v879
      %v1098 = vpop.f32.mrb[0].mxu0
      %v1099 = vadd.f32 %v902, %v1098
      %v1100 = vpop.f32.mrb[0].mxu0
      %v1101 = vpop.f32.mrb[0].mxu0
      %v1102 = vadd.f32 %v902, %v1101
      %v1103 = vpop.f32.mrb[0].mxu0
      %1104 = vmatprep.mubr.bf16.mxu0 0
      %1105 = vmatmul.mubr.bf16.gmra.mrb[0].mxu0 %v880
      %v1106 = vpop.f32.mrb[0].mxu0
      %v1107 = vadd.f32 %v902, %v1106
      %v1108 = vpop.f32.mrb[0].mxu0
      %v1109 = vpop.f32.mrb[0].mxu0
      %v1110 = vadd.f32 %v902, %v1109
      %v1111 = vpop.f32.mrb[0].mxu0
      %1112 = vdwg.mxu0
      %1113 = vst [vmem:[%s280] sm:$0xff] %v987
      %1114 = vst [vmem:[%s280 + $0x8] sm:$0xff] %v990
      %1115 = vst [vmem:[%s280 + $0x10] sm:$0xff] %v995
      %1116 = vst [vmem:[%s280 + $0x18] sm:$0xff] %v998
      %1117 = vst [vmem:[%s280 + $0x20] sm:$0xff] %v1003
      %1118 = vst [vmem:[%s280 + $0x28] sm:$0xff] %v1006
      %1119 = vst [vmem:[%s280 + $0x30] sm:$0xff] %v1011
      %1120 = vst [vmem:[%s280 + $0x38] sm:$0xff] %v1014
      %1121 = vst [vmem:[%s280 + $0x40] sm:$0xff] %v1019
      %1122 = vst [vmem:[%s280 + $0x48] sm:$0xff] %v1022
      %1123 = vst [vmem:[%s280 + $0x50] sm:$0xff] %v1027
      %1124 = vst [vmem:[%s280 + $0x58] sm:$0xff] %v1030
      %1125 = vst [vmem:[%s280 + $0x60] sm:$0xff] %v1035
      %1126 = vst [vmem:[%s280 + $0x68] sm:$0xff] %v1038
      %1127 = vst [vmem:[%s280 + $0x70] sm:$0xff] %v1043
      %1128 = vst [vmem:[%s280 + $0x78] sm:$0xff] %v1046
      %1129 = vst [vmem:[%s280 + $0x80] sm:$0xff] %v1051
      %1130 = vst [vmem:[%s280 + $0x88] sm:$0xff] %v1054
      %1131 = vst [vmem:[%s280 + $0x90] sm:$0xff] %v1059
      %1132 = vst [vmem:[%s280 + $0x98] sm:$0xff] %v1062
      %1133 = vst [vmem:[%s280 + $0xa0] sm:$0xff] %v1067
      %1134 = vst [vmem:[%s280 + $0xa8] sm:$0xff] %v1070
      %1135 = vst [vmem:[%s280 + $0xb0] sm:$0xff] %v1075
      %1136 = vst [vmem:[%s280 + $0xb8] sm:$0xff] %v1078
      %1137 = vst [vmem:[%s280 + $0xc0] sm:$0xff] %v1083
      %1138 = vst [vmem:[%s280 + $0xc8] sm:$0xff] %v1086
      %1139 = vst [vmem:[%s280 + $0xd0] sm:$0xff] %v1091
      %1140 = vst [vmem:[%s280 + $0xd8] sm:$0xff] %v1094
      %1141 = vst [vmem:[%s280 + $0xe0] sm:$0xff] %v1099
      %1142 = vst [vmem:[%s280 + $0xe8] sm:$0xff] %v1102
      %1143 = vst [vmem:[%s280 + $0xf0] sm:$0xff] %v1107
      %1144 = vst [vmem:[%s280 + $0xf8] sm:$0xff] %v1110
      %s1145 = smul.u32 32, %s18
      %p1146 = scmp.lt.s32.totalorder %s1145, 63
      %s1147 = scalar_select %p1146, %s1145, 63
      %s1148 = smul.addr %s1147, 8
      %s1149 = scalar_lea.vmem %s7, %s1148
      // Predicated region
      $region49: #{dqn_forward.1} parent=47 // pred_check
        %p1150 = pneg %p188
      $region50: #{dqn_forward.1} parent=47 // pred_check_branch
        %1152 = sbr.rel (%p1150) target = $region52
      $region51: #{dqn_forward.1} parent=47 // pred_region
        %s1153 = smul.u32 32, %s18
      $region52: #{dqn_forward.1} parent=47 // pred_fallthru
        _
    $region48: #{dqn_forward.1} parent=5 // pred_fallthru
      _
    %p1154 = scmp.le.s32.totalorder 2, %s13
    // Predicated region
    $region53: #{dqn_forward.1} parent=5 // pred_check
      %p1155 = pneg %p1154
    $region54: #{dqn_forward.1} parent=5 // pred_check_branch
      %1157 = sbr.rel (%p1155) target = $region56
    $region55: #{dqn_forward.1} parent=5 // pred_region
      %s1158 = ssub.s32 %s13, 2
      // Predicated region
      $region57: #{dqn_forward.1} parent=55 // pred_check
        %p1159 = pneg %p194
      $region58: #{dqn_forward.1} parent=55 // pred_check_branch
        %1161 = sbr.rel (%p1159) target = $region60
      $region59: #{dqn_forward.1} parent=55 // pred_region
        %s1162 = smul.u32 32, %s19
        %p1163 = scmp.lt.s32.totalorder %s1162, 63
        %s1164 = scalar_select %p1163, %s1162, 63
        %s1165 = smul.addr %s1164, 8
        %s1166 = scalar_lea.vmem %s7, %s1165
      $region60: #{dqn_forward.1} parent=55 // pred_fallthru
        _
    $region56: #{dqn_forward.1} parent=5 // pred_fallthru
      _
  $region6: #{dqn_forward.1} parent=0 // loop_footer
    %s17 = sadd.s32 1, %s13
  $region7: #{dqn_forward.1} parent=0 // loop_footer_branch
    %12 = sbr.rel target = $region3
  $region8: #{dqn_forward.1} parent=0 // loop_exit
    _

</llo_original>
